<compile_context>
chip_gen: v7x
topology: tpu7x:2x2x1
jax: 0.10.0
libtpu: 0.0.40
codegen_flags: <defaults>
</compile_context>

<pallas_src>
import math

import jax
import jax.numpy as jnp
from jax.experimental import pallas as pl
from jax.experimental.pallas import tpu as pltpu


def _patch_split_kernel(x_ref, w_ref, seg_ref, segg_ref, beta_ref, o_ref):
    """One grid step: `tmr` image-rows of W tokens each.

    x_ref    : (tmr*W, dim)      input tokens, already flattened (2D tile)
    w_ref    : (dim, 2*dim)      fused expansion weight      [dim % 128 == 0]
               (2, dim, dim)     per-parity weight halves    [otherwise]
    seg_ref  : (width, 8)        0/1 chunk-membership matrix (stats reduce)
    segg_ref : (8, width)        seg.T * gamma (broadcast-back + gamma fold)
    beta_ref : (1, width)        LayerNorm beta tiled to `width`
    o_ref    : (tmr, 2, W, dim)  row-parity-interleaved output block
    """
    tmr, _, W, dim = o_ref.shape
    c2 = dim // 2
    inv_c2 = 1.0 / c2
    eps = 1e-5

    x = x_ref[...]
    seg = seg_ref[...]
    segg = segg_ref[...]          # gamma already folded in
    beta = beta_ref[...]

    fused = (len(w_ref.shape) == 2)   # static (trace-time) branch
    for r in range(1 if fused else 2):
        w_r = w_ref[...] if fused else w_ref[r]
        # (tmr*W, dim) @ (dim, width) on the MXU, f32 accumulation.
        y = jnp.dot(x, w_r, preferred_element_type=jnp.float32)
        # Per-chunk LayerNorm stats via small segment matmuls (8 stat columns,
        # padded chunks contribute zero): no lane slicing, no concatenate.
        s1 = jnp.dot(y, seg, preferred_element_type=jnp.float32)        # (bm, 8)
        s2 = jnp.dot(y * y, seg, preferred_element_type=jnp.float32)    # (bm, 8)
        mean = s1 * inv_c2
        var = s2 * inv_c2 - mean * mean
        rstd = jax.lax.rsqrt(var + eps)
        # Broadcast per-chunk scale/shift back to full width (gamma folded).
        scale = jnp.dot(rstd, segg, preferred_element_type=jnp.float32)
        shift = jnp.dot(mean * rstd, segg, preferred_element_type=jnp.float32)
        out = y * scale - shift + beta
        # NOTE: the value reshape below is free when W % 8 == 0; otherwise it is
        # a VMEM-side repack of the output tile (still cheaper than padding W
        # in HBM for this HBM-bound kernel).
        if fused:
            # dim % 128 == 0: parity halves are lane-tile-aligned slices.
            for p in range(2):
                o_ref[:, p, :, :] = (
                    out[:, p * dim:(p + 1) * dim]
                    .reshape(tmr, W, dim).astype(o_ref.dtype))
        else:
            o_ref[:, r, :, :] = out.reshape(tmr, W, dim).astype(o_ref.dtype)


def _vmem_capacity_bytes(default=64 * 1024 * 1024):
    """Per-core VMEM capacity (128 MiB on v5e/v6e, 64 MiB on v7x)."""
    try:
        cap = getattr(pltpu.get_tpu_info(), "vmem_capacity_bytes", None)
        if cap:
            return int(cap)
    except Exception:
        pass
    return default


def _pick_rows(M, W, dim, in_isz, out_isz, budget_bytes):
    """Rows (of W tokens) per grid step.

    As many as fit the VMEM budget, but keep >= ~8 grid steps (2-TC sharding +
    pipelining) and keep the flattened token block sublane-aligned so the
    (8,128) BlockSpec rule holds and no input repack is needed.
    """
    per_row = (2 * W * dim * in_isz        # input tile, double-buffered
               + 4 * W * dim * out_isz     # output tile (2 parities), double-buffered
               + 32 * W * dim)             # ~4 live full-(2*dim)-width f32 temporaries
    const = 2 * (2 * dim * dim) * in_isz   # expansion weight, double-buffered
    const += 8 * (17 * (2 * dim))          # seg/segg/beta (tiny)
    avail = max(budget_bytes - const, per_row)
    rows = max(1, avail // per_row)
    rows = min(rows, max(1, (M + 7) // 8))          # keep >= ~8 grid steps
    sub = max(8, 32 // in_isz)                      # sublane count for in dtype
    f = sub // math.gcd(W, sub)
    rows = max(f, (rows // f) * f)                  # (rows*W) % sub == 0
    return int(rows), int(const + rows * per_row)


def patch_splitting(x, w, gamma, beta, *,
                    compute_dtype=jnp.bfloat16,
                    out_dtype=jnp.bfloat16,
                    vmem_budget_bytes=None):
    """Forward pass of PatchSplitting.

    x:     (B, D, H, W, dim)  channels-last tokens
    w:     (2*dim, dim)       nn.Linear(dim, 2*dim, bias=False).weight
    gamma: (dim//2,)          LayerNorm weight
    beta:  (dim//2,)          LayerNorm bias
    compute_dtype: matmul operand dtype (default bf16; f32 accumulation).
    out_dtype:     output dtype (default bf16 to halve output HBM traffic).
    returns (B, D, 2*H, 2*W, dim//2) in out_dtype
    """
    B, D, H, W, dim = x.shape
    assert dim % 2 == 0
    c2 = dim // 2
    M = B * D * H
    Ntok = M * W

    in_dtype = jnp.dtype(compute_dtype)
    o_dtype = jnp.dtype(out_dtype)
    in_isz = in_dtype.itemsize
    out_isz = o_dtype.itemsize

    # Flatten tokens in the wrapper (free HBM reshape): the kernel's input tile
    # is 2D, so there is no in-kernel sublane repack regardless of W.
    x2 = x.reshape(Ntok, dim).astype(in_dtype)

    # Weight prep: columns ordered chunk0..chunk3 (= x @ w.T layout).
    # TODO(synk): store the parameter pre-transposed / pre-split so this
    # per-call transpose (2*dim^2 elements) disappears entirely.
    fused = (dim % 128 == 0)
    w_t = jnp.transpose(w).astype(in_dtype)                    # (dim, 2*dim)
    if fused:
        w_k = w_t                                              # one fused matmul
        width = 2 * dim
    else:
        w_k = jnp.swapaxes(w_t.reshape(dim, 2, dim), 0, 1)     # (2, dim, dim)
        width = dim
    n_real = width // c2                                       # chunks per matmul

    # Chunk-membership matrices for the segment-matmul LayerNorm, padded to 8
    # stat columns (sublane/MXU friendly; padded chunks contribute zero).
    NSTAT = 8
    col_chunk = jnp.arange(width) // c2
    seg = (col_chunk[:, None] == jnp.arange(NSTAT)[None, :]).astype(jnp.float32)
    gamma_w = jnp.tile(gamma.astype(jnp.float32), n_real)      # (width,)
    segg = seg.T * gamma_w[None, :]                            # gamma folded in
    beta_w = jnp.tile(beta.astype(jnp.float32), n_real).reshape(1, width)

    # Generation-aware VMEM budget (~83 MiB on v5e/v6e, ~41 MiB on v7x).
    cap = _vmem_capacity_bytes()
    budget = int(vmem_budget_bytes) if vmem_budget_bytes else int(0.65 * cap)
    tmr, vmem_est = _pick_rows(M, W, dim, in_isz, out_isz, budget)
    n_steps = -(-M // tmr)                                     # cdiv; ragged last block is masked
    vmem_limit = int(min(int(0.9 * cap), max(32 * 1024 * 1024, int(1.25 * vmem_est))))

    # TODO(synk): once pipeline_mode=pl.Buffered(1) is guaranteed on the main
    # pallas_call pipeline, use it for the constant-index weight/seg/beta specs
    # to reclaim their second pipeline buffer.
    out4 = pl.pallas_call(
        _patch_split_kernel,
        out_shape=jax.ShapeDtypeStruct((M, 2, W, dim), o_dtype),
        grid_spec=pltpu.PrefetchScalarGridSpec(
            num_scalar_prefetch=0,
            grid=(n_steps,),
            in_specs=[
                pl.BlockSpec((tmr * W, dim), lambda i: (i, 0)),
                # Constant-index operands: DMA'd once, stay resident in VMEM.
                pl.BlockSpec(w_k.shape, lambda i: (0,) * w_k.ndim),
                pl.BlockSpec(seg.shape, lambda i: (0, 0)),
                pl.BlockSpec(segg.shape, lambda i: (0, 0)),
                pl.BlockSpec(beta_w.shape, lambda i: (0, 0)),
            ],
            out_specs=pl.BlockSpec((tmr, 2, W, dim), lambda i: (i, 0, 0, 0)),
        ),
        compiler_params=pltpu.CompilerParams(
            dimension_semantics=("parallel",),   # shards grid steps across TCs
            vmem_limit_bytes=vmem_limit,
        ),
    )(x2, w_k, seg, segg, beta_w)

    # Free reshapes only: (M,2,W,dim) -> (B,D,H,2,W,2,c2) -> (B,D,2H,2W,c2).
    return out4.reshape(B, D, H, 2, W, 2, c2).reshape(B, D, 2 * H, 2 * W, c2)


def _reference(x, w, gamma, beta):
    """Pure-JAX reference mirroring the PyTorch forward (f32)."""
    B, D, H, W, dim = x.shape
    c2 = dim // 2
    y = x @ w.T  # Linear(dim, 2*dim, bias=False)
    x0, x1, x2, x3 = jnp.split(y, 4, axis=-1)
    merged = jnp.zeros((B, D, 2 * H, 2 * W, c2), jnp.float32)
    merged = merged.at[:, :, 0::2, 0::2, :].set(x0)
    merged = merged.at[:, :, 0::2, 1::2, :].set(x1)
    merged = merged.at[:, :, 1::2, 0::2, :].set(x2)
    merged = merged.at[:, :, 1::2, 1::2, :].set(x3)
    mean = jnp.mean(merged, axis=-1, keepdims=True)
    var = jnp.mean((merged - mean) ** 2, axis=-1, keepdims=True)
    return (merged - mean) * jax.lax.rsqrt(var + 1e-5) * gamma + beta


if __name__ == "__main__":
    # --- Test 1: small f32 shapes, per-parity path, strict tolerance ---------
    B, D, H, W, dim = 2, 2, 4, 4, 32
    kx, kw, kg, kb = jax.random.split(jax.random.PRNGKey(0), 4)
    x = jax.random.normal(kx, (B, D, H, W, dim), dtype=jnp.float32)
    w = 0.02 * jax.random.normal(kw, (2 * dim, dim), dtype=jnp.float32)
    gamma = 1.0 + 0.1 * jax.random.normal(kg, (dim // 2,), dtype=jnp.float32)
    beta = 0.05 * jax.random.normal(kb, (dim // 2,), dtype=jnp.float32)

    fwd_f32 = jax.jit(lambda *a: patch_splitting(
        *a, compute_dtype=jnp.float32, out_dtype=jnp.float32))
    out = jax.block_until_ready(fwd_f32(x, w, gamma, beta))
    ref = _reference(x, w, gamma, beta)
    assert out.shape == (B, D, 2 * H, 2 * W, dim // 2), out.shape
    err = float(jnp.max(jnp.abs(out - ref)))
    assert jnp.allclose(out, ref, atol=1e-4, rtol=1e-4), f"f32 mismatch: {err}"

    # --- Test 2: W=14 (sublane-unaligned), dim=256 (fused path), bf16 defaults,
    #             cdiv grid with a ragged last block -----------------------------
    B, D, H, W, dim = 2, 2, 7, 14, 256
    kx, kw, kg, kb = jax.random.split(jax.random.PRNGKey(1), 4)
    x = jax.random.normal(kx, (B, D, H, W, dim), dtype=jnp.float32)
    w = 0.05 * jax.random.normal(kw, (2 * dim, dim), dtype=jnp.float32)
    gamma = 1.0 + 0.1 * jax.random.normal(kg, (dim // 2,), dtype=jnp.float32)
    beta = 0.05 * jax.random.normal(kb, (dim // 2,), dtype=jnp.float32)
    # Feed bf16-representable inputs so the comparison isolates kernel error
    # (bf16 output rounding), not input quantization.
    xb = x.astype(jnp.bfloat16).astype(jnp.float32)
    wb = w.astype(jnp.bfloat16).astype(jnp.float32)

    out2 = jax.block_until_ready(jax.jit(patch_splitting)(xb, wb, gamma, beta))
    ref2 = _reference(xb, wb, gamma, beta)
    assert out2.shape == (B, D, 2 * H, 2 * W, dim // 2), out2.shape
    assert out2.dtype == jnp.bfloat16, out2.dtype
    err2 = float(jnp.max(jnp.abs(out2.astype(jnp.float32) - ref2)))
    assert err2 < 0.08, f"bf16 mismatch: {err2}"

    print("KERNEL_OK")
</pallas_src>

<mosaic_0001>
module attributes {stable_mosaic.version = 11 : i64} {
  func.func @_patch_split_kernel(%arg0: i32, %arg1: memref<8x32xf32, #tpu.memory_space<vmem>>, %arg2: memref<2x32x32xf32, #tpu.memory_space<vmem>>, %arg3: memref<32x8xf32, #tpu.memory_space<vmem>>, %arg4: memref<8x32xf32, #tpu.memory_space<vmem>>, %arg5: memref<1x32xf32, #tpu.memory_space<vmem>>, %arg6: memref<2x2x4x32xf32, #tpu.memory_space<vmem>>) attributes {dimension_semantics = [#tpu.dimension_semantics<parallel>], iteration_bounds = array<i64: 8>, scalar_prefetch = 0 : i64, scratch_operands = 0 : i64, tpu.core_type = #tpu.core_type<tc>, window_params = [{transform_indices = @transform_0, window_bounds = array<i64: 8, 32>}, {pipeline_mode = #tpu.pipeline_mode<synchronous>, transform_indices = @transform_1, window_bounds = array<i64: 2, 32, 32>}, {pipeline_mode = #tpu.pipeline_mode<synchronous>, transform_indices = @transform_2, window_bounds = array<i64: 32, 8>}, {pipeline_mode = #tpu.pipeline_mode<synchronous>, transform_indices = @transform_3, window_bounds = array<i64: 8, 32>}, {pipeline_mode = #tpu.pipeline_mode<synchronous>, transform_indices = @transform_4, window_bounds = array<i64: 1, 32>}, {transform_indices = @transform_5, window_bounds = array<i64: 2, 2, 4, 32>}]} {
    %c0 = arith.constant 0 : index
    %c0_0 = arith.constant 0 : index
    %0 = vector.load %arg1[%c0, %c0_0] : memref<8x32xf32, #tpu.memory_space<vmem>>, vector<8x32xf32>
    %c0_1 = arith.constant 0 : index
    %c0_2 = arith.constant 0 : index
    %1 = vector.load %arg3[%c0_1, %c0_2] : memref<32x8xf32, #tpu.memory_space<vmem>>, vector<32x8xf32>
    %c0_3 = arith.constant 0 : index
    %c0_4 = arith.constant 0 : index
    %2 = vector.load %arg4[%c0_3, %c0_4] : memref<8x32xf32, #tpu.memory_space<vmem>>, vector<8x32xf32>
    %c0_5 = arith.constant 0 : index
    %c0_6 = arith.constant 0 : index
    %3 = vector.load %arg5[%c0_5, %c0_6] : memref<1x32xf32, #tpu.memory_space<vmem>>, vector<1x32xf32>
    %c0_7 = arith.constant 0 : index
    %c0_8 = arith.constant 0 : index
    %c0_9 = arith.constant 0 : index
    %4 = vector.load %arg2[%c0_7, %c0_8, %c0_9] : memref<2x32x32xf32, #tpu.memory_space<vmem>>, vector<1x32x32xf32>
    %5 = vector.shape_cast %4 : vector<1x32x32xf32> to vector<32x32xf32>
    %cst = arith.constant dense<0.000000e+00> : vector<8x32xf32>
    %6 = tpu.matmul %0, %5, %cst {dimension_numbers = #tpu.dot_dimension_numbers<[1], [0], [0], [1], [0, 0, 1, 1], [], []>} : vector<8x32xf32>, vector<32x32xf32>, vector<8x32xf32> -> vector<8x32xf32>
    %cst_10 = arith.constant dense<0.000000e+00> : vector<8x8xf32>
    %7 = tpu.matmul %6, %1, %cst_10 {dimension_numbers = #tpu.dot_dimension_numbers<[1], [0], [0], [1], [0, 0, 1, 1], [], []>} : vector<8x32xf32>, vector<32x8xf32>, vector<8x8xf32> -> vector<8x8xf32>
    %8 = arith.mulf %6, %6 : vector<8x32xf32>
    %cst_11 = arith.constant dense<0.000000e+00> : vector<8x8xf32>
    %9 = tpu.matmul %8, %1, %cst_11 {dimension_numbers = #tpu.dot_dimension_numbers<[1], [0], [0], [1], [0, 0, 1, 1], [], []>} : vector<8x32xf32>, vector<32x8xf32>, vector<8x8xf32> -> vector<8x8xf32>
    %cst_12 = arith.constant 6.250000e-02 : f32
    %10 = vector.broadcast %cst_12 : f32 to vector<8x8xf32>
    %11 = arith.mulf %7, %10 : vector<8x8xf32>
    %cst_13 = arith.constant 6.250000e-02 : f32
    %12 = vector.broadcast %cst_13 : f32 to vector<8x8xf32>
    %13 = arith.mulf %9, %12 : vector<8x8xf32>
    %14 = arith.mulf %11, %11 : vector<8x8xf32>
    %15 = arith.subf %13, %14 : vector<8x8xf32>
    %cst_14 = arith.constant 9.99999974E-6 : f32
    %16 = vector.broadcast %cst_14 : f32 to vector<8x8xf32>
    %17 = arith.addf %15, %16 : vector<8x8xf32>
    %18 = math.rsqrt %17 : vector<8x8xf32>
    %cst_15 = arith.constant dense<0.000000e+00> : vector<8x32xf32>
    %19 = tpu.matmul %18, %2, %cst_15 {dimension_numbers = #tpu.dot_dimension_numbers<[1], [0], [0], [1], [0, 0, 1, 1], [], []>} : vector<8x8xf32>, vector<8x32xf32>, vector<8x32xf32> -> vector<8x32xf32>
    %20 = arith.mulf %11, %18 : vector<8x8xf32>
    %cst_16 = arith.constant dense<0.000000e+00> : vector<8x32xf32>
    %21 = tpu.matmul %20, %2, %cst_16 {dimension_numbers = #tpu.dot_dimension_numbers<[1], [0], [0], [1], [0, 0, 1, 1], [], []>} : vector<8x8xf32>, vector<8x32xf32>, vector<8x32xf32> -> vector<8x32xf32>
    %22 = arith.mulf %6, %19 : vector<8x32xf32>
    %23 = arith.subf %22, %21 : vector<8x32xf32>
    %24 = vector.broadcast %3 : vector<1x32xf32> to vector<8x32xf32>
    %25 = arith.addf %23, %24 : vector<8x32xf32>
    %26 = vector.shape_cast %25 : vector<8x32xf32> to vector<2x4x32xf32>
    %c0_17 = arith.constant 0 : index
    %c0_18 = arith.constant 0 : index
    %c0_19 = arith.constant 0 : index
    %c0_20 = arith.constant 0 : index
    %27 = vector.load %arg6[%c0_17, %c0_18, %c0_19, %c0_20] : memref<2x2x4x32xf32, #tpu.memory_space<vmem>>, vector<2x1x4x32xf32>
    %28 = vector.shape_cast %27 : vector<2x1x4x32xf32> to vector<2x4x32xf32>
    %29 = vector.shape_cast %26 : vector<2x4x32xf32> to vector<2x1x4x32xf32>
    tpu.vector_store %arg6[%c0_17, %c0_18, %c0_19, %c0_20], %29 {strides = array<i32>} : memref<2x2x4x32xf32, #tpu.memory_space<vmem>>, vector<2x1x4x32xf32>,
    %c1 = arith.constant 1 : index
    %c0_21 = arith.constant 0 : index
    %c0_22 = arith.constant 0 : index
    %30 = vector.load %arg2[%c1, %c0_21, %c0_22] : memref<2x32x32xf32, #tpu.memory_space<vmem>>, vector<1x32x32xf32>
    %31 = vector.shape_cast %30 : vector<1x32x32xf32> to vector<32x32xf32>
    %cst_23 = arith.constant dense<0.000000e+00> : vector<8x32xf32>
    %32 = tpu.matmul %0, %31, %cst_23 {dimension_numbers = #tpu.dot_dimension_numbers<[1], [0], [0], [1], [0, 0, 1, 1], [], []>} : vector<8x32xf32>, vector<32x32xf32>, vector<8x32xf32> -> vector<8x32xf32>
    %cst_24 = arith.constant dense<0.000000e+00> : vector<8x8xf32>
    %33 = tpu.matmul %32, %1, %cst_24 {dimension_numbers = #tpu.dot_dimension_numbers<[1], [0], [0], [1], [0, 0, 1, 1], [], []>} : vector<8x32xf32>, vector<32x8xf32>, vector<8x8xf32> -> vector<8x8xf32>
    %34 = arith.mulf %32, %32 : vector<8x32xf32>
    %cst_25 = arith.constant dense<0.000000e+00> : vector<8x8xf32>
    %35 = tpu.matmul %34, %1, %cst_25 {dimension_numbers = #tpu.dot_dimension_numbers<[1], [0], [0], [1], [0, 0, 1, 1], [], []>} : vector<8x32xf32>, vector<32x8xf32>, vector<8x8xf32> -> vector<8x8xf32>
    %cst_26 = arith.constant 6.250000e-02 : f32
    %36 = vector.broadcast %cst_26 : f32 to vector<8x8xf32>
    %37 = arith.mulf %33, %36 : vector<8x8xf32>
    %cst_27 = arith.constant 6.250000e-02 : f32
    %38 = vector.broadcast %cst_27 : f32 to vector<8x8xf32>
    %39 = arith.mulf %35, %38 : vector<8x8xf32>
    %40 = arith.mulf %37, %37 : vector<8x8xf32>
    %41 = arith.subf %39, %40 : vector<8x8xf32>
    %cst_28 = arith.constant 9.99999974E-6 : f32
    %42 = vector.broadcast %cst_28 : f32 to vector<8x8xf32>
    %43 = arith.addf %41, %42 : vector<8x8xf32>
    %44 = math.rsqrt %43 : vector<8x8xf32>
    %cst_29 = arith.constant dense<0.000000e+00> : vector<8x32xf32>
    %45 = tpu.matmul %44, %2, %cst_29 {dimension_numbers = #tpu.dot_dimension_numbers<[1], [0], [0], [1], [0, 0, 1, 1], [], []>} : vector<8x8xf32>, vector<8x32xf32>, vector<8x32xf32> -> vector<8x32xf32>
    %46 = arith.mulf %37, %44 : vector<8x8xf32>
    %cst_30 = arith.constant dense<0.000000e+00> : vector<8x32xf32>
    %47 = tpu.matmul %46, %2, %cst_30 {dimension_numbers = #tpu.dot_dimension_numbers<[1], [0], [0], [1], [0, 0, 1, 1], [], []>} : vector<8x8xf32>, vector<8x32xf32>, vector<8x32xf32> -> vector<8x32xf32>
    %48 = arith.mulf %32, %45 : vector<8x32xf32>
    %49 = arith.subf %48, %47 : vector<8x32xf32>
    %50 = vector.broadcast %3 : vector<1x32xf32> to vector<8x32xf32>
    %51 = arith.addf %49, %50 : vector<8x32xf32>
    %52 = vector.shape_cast %51 : vector<8x32xf32> to vector<2x4x32xf32>
    %c0_31 = arith.constant 0 : index
    %c1_32 = arith.constant 1 : index
    %c0_33 = arith.constant 0 : index
    %c0_34 = arith.constant 0 : index
    %53 = vector.load %arg6[%c0_31, %c1_32, %c0_33, %c0_34] : memref<2x2x4x32xf32, #tpu.memory_space<vmem>>, vector<2x1x4x32xf32>
    %54 = vector.shape_cast %53 : vector<2x1x4x32xf32> to vector<2x4x32xf32>
    %55 = vector.shape_cast %52 : vector<2x4x32xf32> to vector<2x1x4x32xf32>
    tpu.vector_store %arg6[%c0_31, %c1_32, %c0_33, %c0_34], %55 {strides = array<i32>} : memref<2x2x4x32xf32, #tpu.memory_space<vmem>>, vector<2x1x4x32xf32>,
    return
  }
  func.func @transform_0(%arg0: i32) -> (i32, i32) {
    %c0_i32 = arith.constant 0 : i32
    %c0_i32_0 = arith.constant 0 : i32
    return %arg0, %c0_i32 : i32, i32
  }
  func.func @transform_1(%arg0: i32) -> (i32, i32, i32) {
    %c0_i32 = arith.constant 0 : i32
    %c0_i32_0 = arith.constant 0 : i32
    %c0_i32_1 = arith.constant 0 : i32
    %c0_i32_2 = arith.constant 0 : i32
    return %c0_i32, %c0_i32_0, %c0_i32_1 : i32, i32, i32
  }
  func.func @transform_2(%arg0: i32) -> (i32, i32) {
    %c0_i32 = arith.constant 0 : i32
    %c0_i32_0 = arith.constant 0 : i32
    %c0_i32_1 = arith.constant 0 : i32
    return %c0_i32, %c0_i32_0 : i32, i32
  }
  func.func @transform_3(%arg0: i32) -> (i32, i32) {
    %c0_i32 = arith.constant 0 : i32
    %c0_i32_0 = arith.constant 0 : i32
    %c0_i32_1 = arith.constant 0 : i32
    return %c0_i32, %c0_i32_0 : i32, i32
  }
  func.func @transform_4(%arg0: i32) -> (i32, i32) {
    %c0_i32 = arith.constant 0 : i32
    %c0_i32_0 = arith.constant 0 : i32
    %c0_i32_1 = arith.constant 0 : i32
    return %c0_i32, %c0_i32_0 : i32, i32
  }
  func.func @transform_5(%arg0: i32) -> (i32, i32, i32, i32) {
    %c0_i32 = arith.constant 0 : i32
    %c0_i32_0 = arith.constant 0 : i32
    %c0_i32_1 = arith.constant 0 : i32
    %c0_i32_2 = arith.constant 0 : i32
    return %arg0, %c0_i32, %c0_i32_0, %c0_i32_1 : i32, i32, i32, i32
  }
}

</mosaic_0001>

<llo_original>
// kernel: tile.13
$region0: #{tile.13}
  #allocation0 [shape = 's32[1]{0}', space=sflag, size = 0x4, scoped, tag = 'scoped memory for tile.13']
  %s0 = inlined_call_operand.vmem [shape: f32[16], index: 0, kind: input, shape index: {}]
  %s1 = inlined_call_operand.vmem [shape: f32[2,16], index: 1, kind: output, shape index: {}]
  // Predicated region
  $region2: #{tile.13} parent=0 // pred_check
    _
  $region3: #{tile.13} parent=0 // pred_check_branch
    %3 = sbr.rel (0) target = $region5
  $region4: #{tile.13} parent=0 // pred_region
    _
  $region5: #{tile.13} parent=0 // pred_fallthru
    _
  %v4 = vld [vmem:[%s0] ss:$0 sm:$0xff]
  %5 = vst [vmem:[%s1] sm:$0x3] %v4

// kernel: tile.19
$region0: #{tile.19}
  %s0 = inlined_call_operand.vmem [shape: f32[2,16], index: 0, kind: input, shape index: {}]
  %s1 = inlined_call_operand.vmem [shape: f32[1,32], index: 1, kind: output, shape index: {}]
  $region1: #{tile.19} parent=0
    #allocation0 [shape = 'u8[4096]{0}', space=vmem, size = 0x1000, scoped, tag = 'scoped mem for output reshape']
    #allocation1 [shape = 'u8[4096]{0}', space=vmem, size = 0x1000, scoped, tag = 'scoped mem for input reshape']
    %s3 = sshllo.u32 0, 2
    %v4 = vld [vmem:[%s0] sm:%s3]
    %5 = vst [vmem:[#allocation1] sm:%s3] %v4
    %v6 = vld [vmem:[#allocation1] sm:$0x1]
    %vm7 = vcmask 130048
    %8 = vst.msk [vmem:[#allocation0] sm:$0x1] %vm7, %v6
    %s9 = scalar_lea.vmem [#allocation1], 1
    %v10 = vld [vmem:[%s9] sm:$0x1]
    %11 = vrot.lane.b32.xlu0 %v10, 16
    %v12 = vpop.permute.xlu0 %11
    %vm13 = vcmask 261248
    %14 = vst.msk [vmem:[#allocation0] sm:$0x1] %vm13, %v12
    %s16 = sshllo.u32 0, 1
    %v18 = vld [vmem:[#allocation0] sm:%s16]
    %s19 = sshllo.u32 0, 1
    %20 = vst [vmem:[%s1] sm:%s19] %v18

// kernel: mul.5
$region0: #{mul.5}
  %s0 = inlined_call_operand.vmem [shape: f32[2,16], index: 0, kind: input, shape index: {}]
  %s1 = inlined_call_operand.vmem [shape: f32[32], index: 1, kind: output, shape index: {}]
  $region1: #{mul.5} parent=0
    #allocation0 [shape = 'u8[4096]{0}', space=vmem, size = 0x1000, scoped, tag = 'scoped mem for output reshape']
    #allocation1 [shape = 'u8[4096]{0}', space=vmem, size = 0x1000, scoped, tag = 'scoped mem for input reshape']
    %s3 = sshllo.u32 0, 2
    %v4 = vld [vmem:[%s0] sm:%s3]
    %5 = vst [vmem:[#allocation1] sm:%s3] %v4
    %v6 = vld [vmem:[#allocation1] sm:$0x1]
    %vm7 = vcmask 130048
    %8 = vst.msk [vmem:[#allocation0] sm:$0x1] %vm7, %v6
    %s9 = scalar_lea.vmem [#allocation1], 1
    %v10 = vld [vmem:[%s9] sm:$0x1]
    %11 = vrot.lane.b32.xlu0 %v10, 16
    %v12 = vpop.permute.xlu0 %11
    %vm13 = vcmask 261248
    %14 = vst.msk [vmem:[#allocation0] sm:$0x1] %vm13, %v12
    %s16 = sshllo.u32 0, 1
    %v18 = vld [vmem:[#allocation0] sm:%s16]
    %s19 = sshllo.u32 0, 1
    %20 = vst [vmem:[%s1] sm:%s19] %v18

// kernel: _lambda_.1
$region0: #{_lambda_.1}
  #allocation0 [shape = 'u32[]', space=smem, size = 0x4, offset = 0x4, fixed_abs, tag = 'smem constant byte address 0x4 - core index']
  #allocation1 [shape = 'u32[144,128]{1,0:T(1,128)}', space=vmem, size = 0x12000, scoped, tag = 'internal scratch']
  %s0 = inlined_call_operand.vmem [shape: f32[64,32], index: 0, kind: input, shape index: {}]
  %s1 = inlined_call_operand.vmem [shape: f32[2,32,32], index: 1, kind: input, shape index: {}]
  %s2 = inlined_call_operand.vmem [shape: f32[32,8], index: 2, kind: input, shape index: {}]
  %s3 = inlined_call_operand.vmem [shape: f32[8,32], index: 3, kind: input, shape index: {}]
  %s4 = inlined_call_operand.vmem [shape: f32[1,32], index: 4, kind: input, shape index: {}]
  %s5 = inlined_call_operand.vmem [shape: f32[16,2,4,32], index: 5, kind: output, shape index: {}]
  %s6 = sld [smem:[#allocation0]]
  $region53: #{_lambda_.1} parent=0
    _
  %s8 = ssub.s32 1, %s6
  %s9 = scalar_select 0, %s8, %s6
  loop: start=0, step=1, limit=10
  $region2: #{_lambda_.1} parent=0 // loop_pre_header
    _
  $region3: #{_lambda_.1} parent=0 // loop_header
    %s11 = sphi 0, %s15
    %p12 = scmp.ge.s32.totalorder %s11, 10
    %s21 = sphi 0, %s23
    %s24 = sphi 0, %s21
    %s25 = sphi 0, %s24
    %s41 = sphi 0, %s25
    %s45 = sphi 0, %s45
    %s47 = sphi 0, %s45
    %s48 = sphi 0, %s47
    %s62 = sphi 0, %s48
    %s66 = sphi 0, %s66
    %s68 = sphi 0, %s66
    %s69 = sphi 0, %s68
    %s83 = sphi 0, %s69
    %s87 = sphi 0, %s87
    %s89 = sphi 0, %s87
    %s90 = sphi 0, %s89
    %s104 = sphi 0, %s90
    %s108 = sphi 0, %s108
    %s110 = sphi 0, %s108
    %s111 = sphi 0, %s110
    %s125 = sphi 0, %s111
    %s131 = sphi 0, %s133
    %s134 = sphi 0, %s131
    %s135 = sphi 0, %s134
    %s151 = sphi 0, %s135
  $region4: #{_lambda_.1} parent=0 // loop_header_branch
    %14 = sbr.rel (%p12) target = $region8
  $region5: #{_lambda_.1} parent=0 // loop_body
    %s16 = ssub.s32 %s11, 1
    %s17 = ssub.s32 %s11, 2
    %s18 = sadd.s32 %s11, 1
    %s19 = ssub.s32 %s11, %s18
    %p20 = scmp.eq.s32.totalorder %s19, 0
    %s22 = sadd.s32 %s21, 1
    %s23 = scalar_select %p20, %s21, %s22
    %p26 = pneg %p20
    %p27 = scmp.eq.s32.totalorder %s11, 7
    %p28 = por %p26, %p27
    %p29 = scmp.ne.s32.totalorder %s21, %s24
    %p30 = scmp.eq.s32.totalorder %s11, 0
    %p31 = por %p29, %p30
    %p32 = scmp.ne.s32.totalorder %s21, %s24
    %p33 = scmp.eq.s32.totalorder %s16, 7
    %p34 = por %p32, %p33
    %p35 = scmp.ne.s32.totalorder %s24, %s25
    %p36 = scmp.eq.s32.totalorder %s16, 0
    %p37 = por %p35, %p36
    %p38 = scmp.ne.s32.totalorder %s24, %s25
    %p39 = scmp.eq.s32.totalorder %s17, 7
    %p40 = por %p38, %p39
    %p42 = scmp.ne.s32.totalorder %s25, %s41
    %p43 = scmp.eq.s32.totalorder %s17, 0
    %p44 = por %p42, %p43
    %s46 = sadd.s32 %s45, 1
    %p49 = scmp.eq.s32.totalorder %s11, 7
    %p50 = scmp.ne.s32.totalorder %s45, %s47
    %p51 = scmp.eq.s32.totalorder %s11, 0
    %p52 = por %p50, %p51
    %p53 = scmp.ne.s32.totalorder %s45, %s47
    %p54 = scmp.eq.s32.totalorder %s16, 7
    %p55 = por %p53, %p54
    %p56 = scmp.ne.s32.totalorder %s47, %s48
    %p57 = scmp.eq.s32.totalorder %s16, 0
    %p58 = por %p56, %p57
    %p59 = scmp.ne.s32.totalorder %s47, %s48
    %p60 = scmp.eq.s32.totalorder %s17, 7
    %p61 = por %p59, %p60
    %p63 = scmp.ne.s32.totalorder %s48, %s62
    %p64 = scmp.eq.s32.totalorder %s17, 0
    %p65 = por %p63, %p64
    %s67 = sadd.s32 %s66, 1
    %p70 = scmp.eq.s32.totalorder %s11, 7
    %p71 = scmp.ne.s32.totalorder %s66, %s68
    %p72 = scmp.eq.s32.totalorder %s11, 0
    %p73 = por %p71, %p72
    %p74 = scmp.ne.s32.totalorder %s66, %s68
    %p75 = scmp.eq.s32.totalorder %s16, 7
    %p76 = por %p74, %p75
    %p77 = scmp.ne.s32.totalorder %s68, %s69
    %p78 = scmp.eq.s32.totalorder %s16, 0
    %p79 = por %p77, %p78
    %p80 = scmp.ne.s32.totalorder %s68, %s69
    %p81 = scmp.eq.s32.totalorder %s17, 7
    %p82 = por %p80, %p81
    %p84 = scmp.ne.s32.totalorder %s69, %s83
    %p85 = scmp.eq.s32.totalorder %s17, 0
    %p86 = por %p84, %p85
    %s88 = sadd.s32 %s87, 1
    %p91 = scmp.eq.s32.totalorder %s11, 7
    %p92 = scmp.ne.s32.totalorder %s87, %s89
    %p93 = scmp.eq.s32.totalorder %s11, 0
    %p94 = por %p92, %p93
    %p95 = scmp.ne.s32.totalorder %s87, %s89
    %p96 = scmp.eq.s32.totalorder %s16, 7
    %p97 = por %p95, %p96
    %p98 = scmp.ne.s32.totalorder %s89, %s90
    %p99 = scmp.eq.s32.totalorder %s16, 0
    %p100 = por %p98, %p99
    %p101 = scmp.ne.s32.totalorder %s89, %s90
    %p102 = scmp.eq.s32.totalorder %s17, 7
    %p103 = por %p101, %p102
    %p105 = scmp.ne.s32.totalorder %s90, %s104
    %p106 = scmp.eq.s32.totalorder %s17, 0
    %p107 = por %p105, %p106
    %s109 = sadd.s32 %s108, 1
    %p112 = scmp.eq.s32.totalorder %s11, 7
    %p113 = scmp.ne.s32.totalorder %s108, %s110
    %p114 = scmp.eq.s32.totalorder %s11, 0
    %p115 = por %p113, %p114
    %p116 = scmp.ne.s32.totalorder %s108, %s110
    %p117 = scmp.eq.s32.totalorder %s16, 7
    %p118 = por %p116, %p117
    %p119 = scmp.ne.s32.totalorder %s110, %s111
    %p120 = scmp.eq.s32.totalorder %s16, 0
    %p121 = por %p119, %p120
    %p122 = scmp.ne.s32.totalorder %s110, %s111
    %p123 = scmp.eq.s32.totalorder %s17, 7
    %p124 = por %p122, %p123
    %p126 = scmp.ne.s32.totalorder %s111, %s125
    %p127 = scmp.eq.s32.totalorder %s17, 0
    %p128 = por %p126, %p127
    %s129 = ssub.s32 %s11, %s18
    %p130 = scmp.eq.s32.totalorder %s129, 0
    %s132 = sadd.s32 %s131, 1
    %s133 = scalar_select %p130, %s131, %s132
    %p136 = pneg %p130
    %p137 = scmp.eq.s32.totalorder %s11, 7
    %p138 = por %p136, %p137
    %p139 = scmp.ne.s32.totalorder %s131, %s134
    %p140 = scmp.eq.s32.totalorder %s11, 0
    %p141 = por %p139, %p140
    %p142 = scmp.ne.s32.totalorder %s131, %s134
    %p143 = scmp.eq.s32.totalorder %s16, 7
    %p144 = por %p142, %p143
    %p145 = scmp.ne.s32.totalorder %s134, %s135
    %p146 = scmp.eq.s32.totalorder %s16, 0
    %p147 = por %p145, %p146
    %p148 = scmp.ne.s32.totalorder %s134, %s135
    %p149 = scmp.eq.s32.totalorder %s17, 7
    %p150 = por %p148, %p149
    %p152 = scmp.ne.s32.totalorder %s135, %s151
    %p153 = scmp.eq.s32.totalorder %s17, 0
    %p154 = por %p152, %p153
    %p155 = scmp.le.s32.totalorder 1, %s11
    %p156 = scmp.lt.s32.totalorder %s11, 9
    %p157 = pnand %p155, %p156
    %p158 = pneg %p157
    // Predicated region
    $region9: #{_lambda_.1} parent=5 // pred_check
      _
    $region10: #{_lambda_.1} parent=5 // pred_check_branch
      %160 = sbr.rel (%p157) target = $region12
    $region11: #{_lambda_.1} parent=5 // pred_region
      %s161 = ssub.s32 %s11, 1
      // Predicated region
      $region13: #{_lambda_.1} parent=11 // pred_check
        %p162 = pneg %p58
      $region14: #{_lambda_.1} parent=11 // pred_check_branch
        %164 = sbr.rel (%p162) target = $region16
      $region15: #{_lambda_.1} parent=11 // pred_region
        _
      $region16: #{_lambda_.1} parent=11 // pred_fallthru
        _
      // Predicated region
      $region17: #{_lambda_.1} parent=11 // pred_check
        %p165 = pneg %p79
      $region18: #{_lambda_.1} parent=11 // pred_check_branch
        %167 = sbr.rel (%p165) target = $region20
      $region19: #{_lambda_.1} parent=11 // pred_region
        _
      $region20: #{_lambda_.1} parent=11 // pred_fallthru
        _
      // Predicated region
      $region21: #{_lambda_.1} parent=11 // pred_check
        %p168 = pneg %p100
      $region22: #{_lambda_.1} parent=11 // pred_check_branch
        %170 = sbr.rel (%p168) target = $region24
      $region23: #{_lambda_.1} parent=11 // pred_region
        _
      $region24: #{_lambda_.1} parent=11 // pred_fallthru
        _
      // Predicated region
      $region25: #{_lambda_.1} parent=11 // pred_check
        %p171 = pneg %p121
      $region26: #{_lambda_.1} parent=11 // pred_check_branch
        %173 = sbr.rel (%p171) target = $region28
      $region27: #{_lambda_.1} parent=11 // pred_region
        _
      $region28: #{_lambda_.1} parent=11 // pred_fallthru
        _
    $region12: #{_lambda_.1} parent=5 // pred_fallthru
      _
    %p174 = scmp.lt.s32.totalorder %s11, 8
    // Predicated region
    $region29: #{_lambda_.1} parent=5 // pred_check
      %p175 = pneg %p174
    $region30: #{_lambda_.1} parent=5 // pred_check_branch
      %177 = sbr.rel (%p175) target = $region32
    $region31: #{_lambda_.1} parent=5 // pred_region
      // Predicated region
      $region33: #{_lambda_.1} parent=31 // pred_check
        %p178 = pneg %p31
      $region34: #{_lambda_.1} parent=31 // pred_check_branch
        %180 = sbr.rel (%p178) target = $region36
      $region35: #{_lambda_.1} parent=31 // pred_region
        %p181 = scmp.lt.s32.totalorder %s11, 7
        %s182 = scalar_select %p181, %s11, 7
        %s183 = smul.addr %s182, 8
        %s184 = scalar_lea.vmem %s0, %s183
      $region36: #{_lambda_.1} parent=31 // pred_fallthru
        _
    $region32: #{_lambda_.1} parent=5 // pred_fallthru
      _
    %p185 = scmp.le.s32.totalorder 1, %s11
    %p186 = scmp.lt.s32.totalorder %s11, 9
    %p187 = pnand %p185, %p186
    %p188 = pneg %p187
    // Predicated region
    $region37: #{_lambda_.1} parent=5 // pred_check
      _
    $region38: #{_lambda_.1} parent=5 // pred_check_branch
      %190 = sbr.rel (%p187) target = $region40
    $region39: #{_lambda_.1} parent=5 // pred_region
      %s191 = ssub.s32 %s11, 1
      %p192 = scmp.lt.s32.totalorder %s16, 7
      %s193 = scalar_select %p192, %s16, 7
      %s194 = smul.addr %s193, 8
      %s195 = scalar_lea.vmem %s0, %s194
      %p196 = pneg %p37
      %p197 = pneg %p34
      %p198 = pneg %p58
      %p199 = pneg %p55
      %p200 = pneg %p79
      %p201 = pneg %p76
      %p202 = pneg %p100
      %p203 = pneg %p97
      %p204 = pneg %p121
      %p205 = pneg %p118
      %p206 = pneg %p147
      %p207 = pneg %p144
      %s208 = smul.u32 2, %s16
      %p209 = scmp.lt.s32.totalorder %s208, 15
      %s210 = scalar_select %p209, %s208, 15
      %s211 = smul.addr %s210, 2
      %s212 = smul.addr %s211, 4
      %s213 = scalar_lea.vmem %s5, %s212
      %p214 = scmp.lt.s32.totalorder %s16, 7
      %s215 = scalar_select %p214, %s16, 7
      %s216 = smul.addr %s215, 8
      %s217 = scalar_lea.vmem %s0, %s216
      %s218 = smul.u32 2, %s16
      %p219 = scmp.lt.s32.totalorder %s218, 15
      %s220 = scalar_select %p219, %s218, 15
      %s221 = smul.addr %s220, 2
      %s222 = smul.addr %s221, 4
      %s223 = scalar_lea.vmem %s5, %s222
      %s224 = smul.u32 2, %s16
      %v225 = vld [vmem:[%s217] sm:$0xff]
      %v226 = vld [vmem:[%s2] sm:$0xff]
      %v227 = vld [vmem:[%s2 + $0x8] sm:$0xff]
      %v228 = vld [vmem:[%s2 + $0x10] sm:$0xff]
      %v229 = vld [vmem:[%s2 + $0x18] sm:$0xff]
      %v230 = vld [vmem:[%s3] sm:$0xff]
      %v231 = vld [vmem:[%s4] sm:$0x1]
      %v232 = vld [vmem:[%s1] sm:$0xff]
      %v233 = vld [vmem:[%s1 + $0x8] sm:$0xff]
      %v234 = vld [vmem:[%s1 + $0x10] sm:$0xff]
      %v235 = vld [vmem:[%s1 + $0x18] sm:$0xff]
      %vm236 = vcmask 261120
      %v238 = vsel %vm236, %v225, 0
      %240 = vmatprep.subr.mxu0 0.0
      %241 = vmatpush1.msra.mxu0 %v232
      %242 = vmatprep.subr.mxu0 0.0
      %243 = vmatpush1.msra.mxu0 %v233
      %244 = vmatprep.subr.mxu0 0.0
      %245 = vmatpush1.msra.mxu0 %v234
      %246 = vmatprep.subr.mxu0 0.0
      %247 = vmatpush1.msra.mxu0 %v235
      %248 = vmatprep.subr.mxu0 0.0
      %249 = vmatpush1.msra.mxu0 0.0
      %250 = vmatprep.subr.mxu0 0.0
      %251 = vmatpush1.msra.mxu0 0.0
      %252 = vmatprep.subr.mxu0 0.0
      %253 = vmatpush1.msra.mxu0 0.0
      %254 = vmatprep.subr.mxu0 0.0
      %255 = vmatpush1.msra.mxu0 0.0
      %256 = vmatprep.subr.mxu0 0.0
      %257 = vmatpush1.msra.mxu0 0.0
      %258 = vmatprep.subr.mxu0 0.0
      %259 = vmatpush1.msra.mxu0 0.0
      %260 = vmatprep.subr.mxu0 0.0
      %261 = vmatpush1.msra.mxu0 0.0
      %262 = vmatprep.subr.mxu0 0.0
      %263 = vmatpush1.msra.mxu0 0.0
      %264 = vmatprep.subr.mxu0 0.0
      %265 = vmatpush1.msra.mxu0 0.0
      %266 = vmatprep.subr.mxu0 0.0
      %267 = vmatpush1.msra.mxu0 0.0
      %268 = vmatprep.subr.mxu0 0.0
      %269 = vmatpush1.msra.mxu0 0.0
      %270 = vmatprep.subr.mxu0 0.0
      %271 = vmatpush1.msra.mxu0 0.0
      %272 = vmatprep.subr.mxu0 0.0
      %273 = vmatpush1.msra.mxu0 0.0
      %274 = vmatprep.subr.mxu0 0.0
      %275 = vmatpush1.msra.mxu0 0.0
      %276 = vmatprep.subr.mxu0 0.0
      %277 = vmatpush1.msra.mxu0 0.0
      %278 = vmatprep.subr.mxu0 0.0
      %279 = vmatpush1.msra.mxu0 0.0
      %280 = vmatprep.subr.mxu0 0.0
      %281 = vmatpush1.msra.mxu0 0.0
      %282 = vmatprep.subr.mxu0 0.0
      %283 = vmatpush1.msra.mxu0 0.0
      %284 = vmatprep.subr.mxu0 0.0
      %285 = vmatpush1.msra.mxu0 0.0
      %286 = vmatprep.subr.mxu0 0.0
      %287 = vmatpush1.msra.mxu0 0.0
      %288 = vmatprep.subr.mxu0 0.0
      %289 = vmatpush1.msra.mxu0 0.0
      %290 = vmatprep.subr.mxu0 0.0
      %291 = vmatpush1.msra.mxu0 0.0
      %292 = vmatprep.subr.mxu0 0.0
      %293 = vmatpush1.msra.mxu0 0.0
      %294 = vmatprep.subr.mxu0 0.0
      %295 = vmatpush1.msra.mxu0 0.0
      %296 = vmatprep.subr.mxu0 0.0
      %297 = vmatpush1.msra.mxu0 0.0
      %298 = vmatprep.subr.mxu0 0.0
      %299 = vmatpush1.msra.mxu0 0.0
      %300 = vmatprep.subr.mxu0 0.0
      %301 = vmatpush1.msra.mxu0 0.0
      %302 = vmatprep.subr.mxu0 0.0
      %303 = vmatpush1.msra.mxu0 0.0
      %304 = vmatprep.mubr.f32.mxu0 0.0
      %305 = vmatmul.mubr.f32.gmra.mrb[0].mxu0 %v238
      %v306 = vpop.f32.mrb[0].mxu0
      %v307 = vadd.f32 0.0, %v306
      %v308 = vpop.f32.mrb[0].mxu0
      %309 = vdwg.mxu0
      %v311 = vsel %vm236, %v307, 0
      %313 = vmatprep.subr.mxu0 0.0
      %314 = vmatpush1.msra.mxu0 %v226
      %315 = vmatprep.subr.mxu0 0.0
      %316 = vmatpush1.msra.mxu0 %v227
      %317 = vmatprep.subr.mxu0 0.0
      %318 = vmatpush1.msra.mxu0 %v228
      %319 = vmatprep.subr.mxu0 0.0
      %320 = vmatpush1.msra.mxu0 %v229
      %321 = vmatprep.subr.mxu0 0.0
      %322 = vmatpush1.msra.mxu0 0.0
      %323 = vmatprep.subr.mxu0 0.0
      %324 = vmatpush1.msra.mxu0 0.0
      %325 = vmatprep.subr.mxu0 0.0
      %326 = vmatpush1.msra.mxu0 0.0
      %327 = vmatprep.subr.mxu0 0.0
      %328 = vmatpush1.msra.mxu0 0.0
      %329 = vmatprep.subr.mxu0 0.0
      %330 = vmatpush1.msra.mxu0 0.0
      %331 = vmatprep.subr.mxu0 0.0
      %332 = vmatpush1.msra.mxu0 0.0
      %333 = vmatprep.subr.mxu0 0.0
      %334 = vmatpush1.msra.mxu0 0.0
      %335 = vmatprep.subr.mxu0 0.0
      %336 = vmatpush1.msra.mxu0 0.0
      %337 = vmatprep.subr.mxu0 0.0
      %338 = vmatpush1.msra.mxu0 0.0
      %339 = vmatprep.subr.mxu0 0.0
      %340 = vmatpush1.msra.mxu0 0.0
      %341 = vmatprep.subr.mxu0 0.0
      %342 = vmatpush1.msra.mxu0 0.0
      %343 = vmatprep.subr.mxu0 0.0
      %344 = vmatpush1.msra.mxu0 0.0
      %345 = vmatprep.subr.mxu0 0.0
      %346 = vmatpush1.msra.mxu0 0.0
      %347 = vmatprep.subr.mxu0 0.0
      %348 = vmatpush1.msra.mxu0 0.0
      %349 = vmatprep.subr.mxu0 0.0
      %350 = vmatpush1.msra.mxu0 0.0
      %351 = vmatprep.subr.mxu0 0.0
      %352 = vmatpush1.msra.mxu0 0.0
      %353 = vmatprep.subr.mxu0 0.0
      %354 = vmatpush1.msra.mxu0 0.0
      %355 = vmatprep.subr.mxu0 0.0
      %356 = vmatpush1.msra.mxu0 0.0
      %357 = vmatprep.subr.mxu0 0.0
      %358 = vmatpush1.msra.mxu0 0.0
      %359 = vmatprep.subr.mxu0 0.0
      %360 = vmatpush1.msra.mxu0 0.0
      %361 = vmatprep.subr.mxu0 0.0
      %362 = vmatpush1.msra.mxu0 0.0
      %363 = vmatprep.subr.mxu0 0.0
      %364 = vmatpush1.msra.mxu0 0.0
      %365 = vmatprep.subr.mxu0 0.0
      %366 = vmatpush1.msra.mxu0 0.0
      %367 = vmatprep.subr.mxu0 0.0
      %368 = vmatpush1.msra.mxu0 0.0
      %369 = vmatprep.subr.mxu0 0.0
      %370 = vmatpush1.msra.mxu0 0.0
      %371 = vmatprep.subr.mxu0 0.0
      %372 = vmatpush1.msra.mxu0 0.0
      %373 = vmatprep.subr.mxu0 0.0
      %374 = vmatpush1.msra.mxu0 0.0
      %375 = vmatprep.subr.mxu0 0.0
      %376 = vmatpush1.msra.mxu0 0.0
      %377 = vmatprep.mubr.f32.mxu0 0.0
      %378 = vmatmul.mubr.f32.gmra.mrb[0].mxu0 %v311
      %v379 = vpop.f32.mrb[0].mxu0
      %v380 = vadd.f32 0.0, %v379
      %v381 = vpop.f32.mrb[0].mxu0
      %382 = vdwg.mxu0
      %v383 = vmul.f32 %v307, %v307
      %v385 = vsel %vm236, %v383, 0
      %387 = vmatprep.subr.mxu0 0.0
      %388 = vmatpush1.msra.mxu0 %v226
      %389 = vmatprep.subr.mxu0 0.0
      %390 = vmatpush1.msra.mxu0 %v227
      %391 = vmatprep.subr.mxu0 0.0
      %392 = vmatpush1.msra.mxu0 %v228
      %393 = vmatprep.subr.mxu0 0.0
      %394 = vmatpush1.msra.mxu0 %v229
      %395 = vmatprep.subr.mxu0 0.0
      %396 = vmatpush1.msra.mxu0 0.0
      %397 = vmatprep.subr.mxu0 0.0
      %398 = vmatpush1.msra.mxu0 0.0
      %399 = vmatprep.subr.mxu0 0.0
      %400 = vmatpush1.msra.mxu0 0.0
      %401 = vmatprep.subr.mxu0 0.0
      %402 = vmatpush1.msra.mxu0 0.0
      %403 = vmatprep.subr.mxu0 0.0
      %404 = vmatpush1.msra.mxu0 0.0
      %405 = vmatprep.subr.mxu0 0.0
      %406 = vmatpush1.msra.mxu0 0.0
      %407 = vmatprep.subr.mxu0 0.0
      %408 = vmatpush1.msra.mxu0 0.0
      %409 = vmatprep.subr.mxu0 0.0
      %410 = vmatpush1.msra.mxu0 0.0
      %411 = vmatprep.subr.mxu0 0.0
      %412 = vmatpush1.msra.mxu0 0.0
      %413 = vmatprep.subr.mxu0 0.0
      %414 = vmatpush1.msra.mxu0 0.0
      %415 = vmatprep.subr.mxu0 0.0
      %416 = vmatpush1.msra.mxu0 0.0
      %417 = vmatprep.subr.mxu0 0.0
      %418 = vmatpush1.msra.mxu0 0.0
      %419 = vmatprep.subr.mxu0 0.0
      %420 = vmatpush1.msra.mxu0 0.0
      %421 = vmatprep.subr.mxu0 0.0
      %422 = vmatpush1.msra.mxu0 0.0
      %423 = vmatprep.subr.mxu0 0.0
      %424 = vmatpush1.msra.mxu0 0.0
      %425 = vmatprep.subr.mxu0 0.0
      %426 = vmatpush1.msra.mxu0 0.0
      %427 = vmatprep.subr.mxu0 0.0
      %428 = vmatpush1.msra.mxu0 0.0
      %429 = vmatprep.subr.mxu0 0.0
      %430 = vmatpush1.msra.mxu0 0.0
      %431 = vmatprep.subr.mxu0 0.0
      %432 = vmatpush1.msra.mxu0 0.0
      %433 = vmatprep.subr.mxu0 0.0
      %434 = vmatpush1.msra.mxu0 0.0
      %435 = vmatprep.subr.mxu0 0.0
      %436 = vmatpush1.msra.mxu0 0.0
      %437 = vmatprep.subr.mxu0 0.0
      %438 = vmatpush1.msra.mxu0 0.0
      %439 = vmatprep.subr.mxu0 0.0
      %440 = vmatpush1.msra.mxu0 0.0
      %441 = vmatprep.subr.mxu0 0.0
      %442 = vmatpush1.msra.mxu0 0.0
      %443 = vmatprep.subr.mxu0 0.0
      %444 = vmatpush1.msra.mxu0 0.0
      %445 = vmatprep.subr.mxu0 0.0
      %446 = vmatpush1.msra.mxu0 0.0
      %447 = vmatprep.subr.mxu0 0.0
      %448 = vmatpush1.msra.mxu0 0.0
      %449 = vmatprep.subr.mxu0 0.0
      %450 = vmatpush1.msra.mxu0 0.0
      %451 = vmatprep.mubr.f32.mxu0 0.0
      %452 = vmatmul.mubr.f32.gmra.mrb[0].mxu0 %v385
      %v453 = vpop.f32.mrb[0].mxu0
      %v454 = vadd.f32 0.0, %v453
      %v455 = vpop.f32.mrb[0].mxu0
      %456 = vdwg.mxu0
      %v457 = vmul.f32 %v380, 0.0625
      %v458 = vmul.f32 %v454, 0.0625
      %v459 = vmul.f32 %v457, %v457
      %v460 = vsub.f32 %v458, %v459
      %v461 = vadd.f32 %v460, 1e-05
      %v462 = vrsqrt.pop %v461
      %vm463 = vcmask 64512
      %v465 = vsel %vm463, %v462, 0
      %467 = vmatprep.subr.mxu0 0.0
      %468 = vmatpush1.msra.mxu0 %v230
      %469 = vmatprep.subr.mxu0 0.0
      %470 = vmatpush1.msra.mxu0 0.0
      %471 = vmatprep.subr.mxu0 0.0
      %472 = vmatpush1.msra.mxu0 0.0
      %473 = vmatprep.subr.mxu0 0.0
      %474 = vmatpush1.msra.mxu0 0.0
      %475 = vmatprep.subr.mxu0 0.0
      %476 = vmatpush1.msra.mxu0 0.0
      %477 = vmatprep.subr.mxu0 0.0
      %478 = vmatpush1.msra.mxu0 0.0
      %479 = vmatprep.subr.mxu0 0.0
      %480 = vmatpush1.msra.mxu0 0.0
      %481 = vmatprep.subr.mxu0 0.0
      %482 = vmatpush1.msra.mxu0 0.0
      %483 = vmatprep.subr.mxu0 0.0
      %484 = vmatpush1.msra.mxu0 0.0
      %485 = vmatprep.subr.mxu0 0.0
      %486 = vmatpush1.msra.mxu0 0.0
      %487 = vmatprep.subr.mxu0 0.0
      %488 = vmatpush1.msra.mxu0 0.0
      %489 = vmatprep.subr.mxu0 0.0
      %490 = vmatpush1.msra.mxu0 0.0
      %491 = vmatprep.subr.mxu0 0.0
      %492 = vmatpush1.msra.mxu0 0.0
      %493 = vmatprep.subr.mxu0 0.0
      %494 = vmatpush1.msra.mxu0 0.0
      %495 = vmatprep.subr.mxu0 0.0
      %496 = vmatpush1.msra.mxu0 0.0
      %497 = vmatprep.subr.mxu0 0.0
      %498 = vmatpush1.msra.mxu0 0.0
      %499 = vmatprep.subr.mxu0 0.0
      %500 = vmatpush1.msra.mxu0 0.0
      %501 = vmatprep.subr.mxu0 0.0
      %502 = vmatpush1.msra.mxu0 0.0
      %503 = vmatprep.subr.mxu0 0.0
      %504 = vmatpush1.msra.mxu0 0.0
      %505 = vmatprep.subr.mxu0 0.0
      %506 = vmatpush1.msra.mxu0 0.0
      %507 = vmatprep.subr.mxu0 0.0
      %508 = vmatpush1.msra.mxu0 0.0
      %509 = vmatprep.subr.mxu0 0.0
      %510 = vmatpush1.msra.mxu0 0.0
      %511 = vmatprep.subr.mxu0 0.0
      %512 = vmatpush1.msra.mxu0 0.0
      %513 = vmatprep.subr.mxu0 0.0
      %514 = vmatpush1.msra.mxu0 0.0
      %515 = vmatprep.subr.mxu0 0.0
      %516 = vmatpush1.msra.mxu0 0.0
      %517 = vmatprep.subr.mxu0 0.0
      %518 = vmatpush1.msra.mxu0 0.0
      %519 = vmatprep.subr.mxu0 0.0
      %520 = vmatpush1.msra.mxu0 0.0
      %521 = vmatprep.subr.mxu0 0.0
      %522 = vmatpush1.msra.mxu0 0.0
      %523 = vmatprep.subr.mxu0 0.0
      %524 = vmatpush1.msra.mxu0 0.0
      %525 = vmatprep.subr.mxu0 0.0
      %526 = vmatpush1.msra.mxu0 0.0
      %527 = vmatprep.subr.mxu0 0.0
      %528 = vmatpush1.msra.mxu0 0.0
      %529 = vmatprep.subr.mxu0 0.0
      %530 = vmatpush1.msra.mxu0 0.0
      %531 = vmatprep.mubr.f32.mxu0 0.0
      %532 = vmatmul.mubr.f32.gmra.mrb[0].mxu0 %v465
      %v533 = vpop.f32.mrb[0].mxu0
      %v534 = vadd.f32 0.0, %v533
      %v535 = vpop.f32.mrb[0].mxu0
      %536 = vdwg.mxu0
      %v537 = vmul.f32 %v457, %v462
      %v539 = vsel %vm463, %v537, 0
      %541 = vmatprep.subr.mxu0 0.0
      %542 = vmatpush1.msra.mxu0 %v230
      %543 = vmatprep.subr.mxu0 0.0
      %544 = vmatpush1.msra.mxu0 0.0
      %545 = vmatprep.subr.mxu0 0.0
      %546 = vmatpush1.msra.mxu0 0.0
      %547 = vmatprep.subr.mxu0 0.0
      %548 = vmatpush1.msra.mxu0 0.0
      %549 = vmatprep.subr.mxu0 0.0
      %550 = vmatpush1.msra.mxu0 0.0
      %551 = vmatprep.subr.mxu0 0.0
      %552 = vmatpush1.msra.mxu0 0.0
      %553 = vmatprep.subr.mxu0 0.0
      %554 = vmatpush1.msra.mxu0 0.0
      %555 = vmatprep.subr.mxu0 0.0
      %556 = vmatpush1.msra.mxu0 0.0
      %557 = vmatprep.subr.mxu0 0.0
      %558 = vmatpush1.msra.mxu0 0.0
      %559 = vmatprep.subr.mxu0 0.0
      %560 = vmatpush1.msra.mxu0 0.0
      %561 = vmatprep.subr.mxu0 0.0
      %562 = vmatpush1.msra.mxu0 0.0
      %563 = vmatprep.subr.mxu0 0.0
      %564 = vmatpush1.msra.mxu0 0.0
      %565 = vmatprep.subr.mxu0 0.0
      %566 = vmatpush1.msra.mxu0 0.0
      %567 = vmatprep.subr.mxu0 0.0
      %568 = vmatpush1.msra.mxu0 0.0
      %569 = vmatprep.subr.mxu0 0.0
      %570 = vmatpush1.msra.mxu0 0.0
      %571 = vmatprep.subr.mxu0 0.0
      %572 = vmatpush1.msra.mxu0 0.0
      %573 = vmatprep.subr.mxu0 0.0
      %574 = vmatpush1.msra.mxu0 0.0
      %575 = vmatprep.subr.mxu0 0.0
      %576 = vmatpush1.msra.mxu0 0.0
      %577 = vmatprep.subr.mxu0 0.0
      %578 = vmatpush1.msra.mxu0 0.0
      %579 = vmatprep.subr.mxu0 0.0
      %580 = vmatpush1.msra.mxu0 0.0
      %581 = vmatprep.subr.mxu0 0.0
      %582 = vmatpush1.msra.mxu0 0.0
      %583 = vmatprep.subr.mxu0 0.0
      %584 = vmatpush1.msra.mxu0 0.0
      %585 = vmatprep.subr.mxu0 0.0
      %586 = vmatpush1.msra.mxu0 0.0
      %587 = vmatprep.subr.mxu0 0.0
      %588 = vmatpush1.msra.mxu0 0.0
      %589 = vmatprep.subr.mxu0 0.0
      %590 = vmatpush1.msra.mxu0 0.0
      %591 = vmatprep.subr.mxu0 0.0
      %592 = vmatpush1.msra.mxu0 0.0
      %593 = vmatprep.subr.mxu0 0.0
      %594 = vmatpush1.msra.mxu0 0.0
      %595 = vmatprep.subr.mxu0 0.0
      %596 = vmatpush1.msra.mxu0 0.0
      %597 = vmatprep.subr.mxu0 0.0
      %598 = vmatpush1.msra.mxu0 0.0
      %599 = vmatprep.subr.mxu0 0.0
      %600 = vmatpush1.msra.mxu0 0.0
      %601 = vmatprep.subr.mxu0 0.0
      %602 = vmatpush1.msra.mxu0 0.0
      %603 = vmatprep.subr.mxu0 0.0
      %604 = vmatpush1.msra.mxu0 0.0
      %605 = vmatprep.mubr.f32.mxu0 0.0
      %606 = vmatmul.mubr.f32.gmra.mrb[0].mxu0 %v539
      %v607 = vpop.f32.mrb[0].mxu0
      %v608 = vadd.f32 0.0, %v607
      %v609 = vpop.f32.mrb[0].mxu0
      %610 = vdwg.mxu0
      %v611 = vmul.f32 %v307, %v534
      %v612 = vsub.f32 %v611, %v608
      %v614 = vlaneseq
      %v615 = vshrl.u32 %v614, 7
      %v616 = vsub.s32 0, %v615
      %v617 = vrot.slane %v231, %v616
      %v619 = vadd.f32 %v612, %v617
      %v621 = vcombine.high %v619, %v619
      %vm623 = vcmask 257024
      %624 = vst.msk [vmem:[%s223] sm:$0xf] %vm623, %v619
      %625 = vst.msk [vmem:[%s223 + $0x8] sm:$0xf] %vm623, %v621
      %s626 = scalar_lea.vmem %s1, 32
      %v627 = vld [vmem:[%s626] sm:$0xff]
      %v628 = vld [vmem:[%s626 + $0x8] sm:$0xff]
      %v629 = vld [vmem:[%s626 + $0x10] sm:$0xff]
      %v630 = vld [vmem:[%s626 + $0x18] sm:$0xff]
      %631 = vmatprep.subr.mxu0 0.0
      %632 = vmatpush1.msra.mxu0 %v627
      %633 = vmatprep.subr.mxu0 0.0
      %634 = vmatpush1.msra.mxu0 %v628
      %635 = vmatprep.subr.mxu0 0.0
      %636 = vmatpush1.msra.mxu0 %v629
      %637 = vmatprep.subr.mxu0 0.0
      %638 = vmatpush1.msra.mxu0 %v630
      %639 = vmatprep.subr.mxu0 0.0
      %640 = vmatpush1.msra.mxu0 0.0
      %641 = vmatprep.subr.mxu0 0.0
      %642 = vmatpush1.msra.mxu0 0.0
      %643 = vmatprep.subr.mxu0 0.0
      %644 = vmatpush1.msra.mxu0 0.0
      %645 = vmatprep.subr.mxu0 0.0
      %646 = vmatpush1.msra.mxu0 0.0
      %647 = vmatprep.subr.mxu0 0.0
      %648 = vmatpush1.msra.mxu0 0.0
      %649 = vmatprep.subr.mxu0 0.0
      %650 = vmatpush1.msra.mxu0 0.0
      %651 = vmatprep.subr.mxu0 0.0
      %652 = vmatpush1.msra.mxu0 0.0
      %653 = vmatprep.subr.mxu0 0.0
      %654 = vmatpush1.msra.mxu0 0.0
      %655 = vmatprep.subr.mxu0 0.0
      %656 = vmatpush1.msra.mxu0 0.0
      %657 = vmatprep.subr.mxu0 0.0
      %658 = vmatpush1.msra.mxu0 0.0
      %659 = vmatprep.subr.mxu0 0.0
      %660 = vmatpush1.msra.mxu0 0.0
      %661 = vmatprep.subr.mxu0 0.0
      %662 = vmatpush1.msra.mxu0 0.0
      %663 = vmatprep.subr.mxu0 0.0
      %664 = vmatpush1.msra.mxu0 0.0
      %665 = vmatprep.subr.mxu0 0.0
      %666 = vmatpush1.msra.mxu0 0.0
      %667 = vmatprep.subr.mxu0 0.0
      %668 = vmatpush1.msra.mxu0 0.0
      %669 = vmatprep.subr.mxu0 0.0
      %670 = vmatpush1.msra.mxu0 0.0
      %671 = vmatprep.subr.mxu0 0.0
      %672 = vmatpush1.msra.mxu0 0.0
      %673 = vmatprep.subr.mxu0 0.0
      %674 = vmatpush1.msra.mxu0 0.0
      %675 = vmatprep.subr.mxu0 0.0
      %676 = vmatpush1.msra.mxu0 0.0
      %677 = vmatprep.subr.mxu0 0.0
      %678 = vmatpush1.msra.mxu0 0.0
      %679 = vmatprep.subr.mxu0 0.0
      %680 = vmatpush1.msra.mxu0 0.0
      %681 = vmatprep.subr.mxu0 0.0
      %682 = vmatpush1.msra.mxu0 0.0
      %683 = vmatprep.subr.mxu0 0.0
      %684 = vmatpush1.msra.mxu0 0.0
      %685 = vmatprep.subr.mxu0 0.0
      %686 = vmatpush1.msra.mxu0 0.0
      %687 = vmatprep.subr.mxu0 0.0
      %688 = vmatpush1.msra.mxu0 0.0
      %689 = vmatprep.subr.mxu0 0.0
      %690 = vmatpush1.msra.mxu0 0.0
      %691 = vmatprep.subr.mxu0 0.0
      %692 = vmatpush1.msra.mxu0 0.0
      %693 = vmatprep.subr.mxu0 0.0
      %694 = vmatpush1.msra.mxu0 0.0
      %695 = vmatprep.mubr.f32.mxu0 0.0
      %696 = vmatmul.mubr.f32.gmra.mrb[0].mxu0 %v238
      %v697 = vpop.f32.mrb[0].mxu0
      %v698 = vadd.f32 0.0, %v697
      %v699 = vpop.f32.mrb[0].mxu0
      %700 = vdwg.mxu0
      %v702 = vsel %vm236, %v698, 0
      %704 = vmatprep.subr.mxu0 0.0
      %705 = vmatpush1.msra.mxu0 %v226
      %706 = vmatprep.subr.mxu0 0.0
      %707 = vmatpush1.msra.mxu0 %v227
      %708 = vmatprep.subr.mxu0 0.0
      %709 = vmatpush1.msra.mxu0 %v228
      %710 = vmatprep.subr.mxu0 0.0
      %711 = vmatpush1.msra.mxu0 %v229
      %712 = vmatprep.subr.mxu0 0.0
      %713 = vmatpush1.msra.mxu0 0.0
      %714 = vmatprep.subr.mxu0 0.0
      %715 = vmatpush1.msra.mxu0 0.0
      %716 = vmatprep.subr.mxu0 0.0
      %717 = vmatpush1.msra.mxu0 0.0
      %718 = vmatprep.subr.mxu0 0.0
      %719 = vmatpush1.msra.mxu0 0.0
      %720 = vmatprep.subr.mxu0 0.0
      %721 = vmatpush1.msra.mxu0 0.0
      %722 = vmatprep.subr.mxu0 0.0
      %723 = vmatpush1.msra.mxu0 0.0
      %724 = vmatprep.subr.mxu0 0.0
      %725 = vmatpush1.msra.mxu0 0.0
      %726 = vmatprep.subr.mxu0 0.0
      %727 = vmatpush1.msra.mxu0 0.0
      %728 = vmatprep.subr.mxu0 0.0
      %729 = vmatpush1.msra.mxu0 0.0
      %730 = vmatprep.subr.mxu0 0.0
      %731 = vmatpush1.msra.mxu0 0.0
      %732 = vmatprep.subr.mxu0 0.0
      %733 = vmatpush1.msra.mxu0 0.0
      %734 = vmatprep.subr.mxu0 0.0
      %735 = vmatpush1.msra.mxu0 0.0
      %736 = vmatprep.subr.mxu0 0.0
      %737 = vmatpush1.msra.mxu0 0.0
      %738 = vmatprep.subr.mxu0 0.0
      %739 = vmatpush1.msra.mxu0 0.0
      %740 = vmatprep.subr.mxu0 0.0
      %741 = vmatpush1.msra.mxu0 0.0
      %742 = vmatprep.subr.mxu0 0.0
      %743 = vmatpush1.msra.mxu0 0.0
      %744 = vmatprep.subr.mxu0 0.0
      %745 = vmatpush1.msra.mxu0 0.0
      %746 = vmatprep.subr.mxu0 0.0
      %747 = vmatpush1.msra.mxu0 0.0
      %748 = vmatprep.subr.mxu0 0.0
      %749 = vmatpush1.msra.mxu0 0.0
      %750 = vmatprep.subr.mxu0 0.0
      %751 = vmatpush1.msra.mxu0 0.0
      %752 = vmatprep.subr.mxu0 0.0
      %753 = vmatpush1.msra.mxu0 0.0
      %754 = vmatprep.subr.mxu0 0.0
      %755 = vmatpush1.msra.mxu0 0.0
      %756 = vmatprep.subr.mxu0 0.0
      %757 = vmatpush1.msra.mxu0 0.0
      %758 = vmatprep.subr.mxu0 0.0
      %759 = vmatpush1.msra.mxu0 0.0
      %760 = vmatprep.subr.mxu0 0.0
      %761 = vmatpush1.msra.mxu0 0.0
      %762 = vmatprep.subr.mxu0 0.0
      %763 = vmatpush1.msra.mxu0 0.0
      %764 = vmatprep.subr.mxu0 0.0
      %765 = vmatpush1.msra.mxu0 0.0
      %766 = vmatprep.subr.mxu0 0.0
      %767 = vmatpush1.msra.mxu0 0.0
      %768 = vmatprep.mubr.f32.mxu0 0.0
      %769 = vmatmul.mubr.f32.gmra.mrb[0].mxu0 %v702
      %v770 = vpop.f32.mrb[0].mxu0
      %v771 = vadd.f32 0.0, %v770
      %v772 = vpop.f32.mrb[0].mxu0
      %773 = vdwg.mxu0
      %v774 = vmul.f32 %v698, %v698
      %v776 = vsel %vm236, %v774, 0
      %778 = vmatprep.subr.mxu0 0.0
      %779 = vmatpush1.msra.mxu0 %v226
      %780 = vmatprep.subr.mxu0 0.0
      %781 = vmatpush1.msra.mxu0 %v227
      %782 = vmatprep.subr.mxu0 0.0
      %783 = vmatpush1.msra.mxu0 %v228
      %784 = vmatprep.subr.mxu0 0.0
      %785 = vmatpush1.msra.mxu0 %v229
      %786 = vmatprep.subr.mxu0 0.0
      %787 = vmatpush1.msra.mxu0 0.0
      %788 = vmatprep.subr.mxu0 0.0
      %789 = vmatpush1.msra.mxu0 0.0
      %790 = vmatprep.subr.mxu0 0.0
      %791 = vmatpush1.msra.mxu0 0.0
      %792 = vmatprep.subr.mxu0 0.0
      %793 = vmatpush1.msra.mxu0 0.0
      %794 = vmatprep.subr.mxu0 0.0
      %795 = vmatpush1.msra.mxu0 0.0
      %796 = vmatprep.subr.mxu0 0.0
      %797 = vmatpush1.msra.mxu0 0.0
      %798 = vmatprep.subr.mxu0 0.0
      %799 = vmatpush1.msra.mxu0 0.0
      %800 = vmatprep.subr.mxu0 0.0
      %801 = vmatpush1.msra.mxu0 0.0
      %802 = vmatprep.subr.mxu0 0.0
      %803 = vmatpush1.msra.mxu0 0.0
      %804 = vmatprep.subr.mxu0 0.0
      %805 = vmatpush1.msra.mxu0 0.0
      %806 = vmatprep.subr.mxu0 0.0
      %807 = vmatpush1.msra.mxu0 0.0
      %808 = vmatprep.subr.mxu0 0.0
      %809 = vmatpush1.msra.mxu0 0.0
      %810 = vmatprep.subr.mxu0 0.0
      %811 = vmatpush1.msra.mxu0 0.0
      %812 = vmatprep.subr.mxu0 0.0
      %813 = vmatpush1.msra.mxu0 0.0
      %814 = vmatprep.subr.mxu0 0.0
      %815 = vmatpush1.msra.mxu0 0.0
      %816 = vmatprep.subr.mxu0 0.0
      %817 = vmatpush1.msra.mxu0 0.0
      %818 = vmatprep.subr.mxu0 0.0
      %819 = vmatpush1.msra.mxu0 0.0
      %820 = vmatprep.subr.mxu0 0.0
      %821 = vmatpush1.msra.mxu0 0.0
      %822 = vmatprep.subr.mxu0 0.0
      %823 = vmatpush1.msra.mxu0 0.0
      %824 = vmatprep.subr.mxu0 0.0
      %825 = vmatpush1.msra.mxu0 0.0
      %826 = vmatprep.subr.mxu0 0.0
      %827 = vmatpush1.msra.mxu0 0.0
      %828 = vmatprep.subr.mxu0 0.0
      %829 = vmatpush1.msra.mxu0 0.0
      %830 = vmatprep.subr.mxu0 0.0
      %831 = vmatpush1.msra.mxu0 0.0
      %832 = vmatprep.subr.mxu0 0.0
      %833 = vmatpush1.msra.mxu0 0.0
      %834 = vmatprep.subr.mxu0 0.0
      %835 = vmatpush1.msra.mxu0 0.0
      %836 = vmatprep.subr.mxu0 0.0
      %837 = vmatpush1.msra.mxu0 0.0
      %838 = vmatprep.subr.mxu0 0.0
      %839 = vmatpush1.msra.mxu0 0.0
      %840 = vmatprep.subr.mxu0 0.0
      %841 = vmatpush1.msra.mxu0 0.0
      %842 = vmatprep.mubr.f32.mxu0 0.0
      %843 = vmatmul.mubr.f32.gmra.mrb[0].mxu0 %v776
      %v844 = vpop.f32.mrb[0].mxu0
      %v845 = vadd.f32 0.0, %v844
      %v846 = vpop.f32.mrb[0].mxu0
      %847 = vdwg.mxu0
      %v848 = vmul.f32 %v771, 0.0625
      %v849 = vmul.f32 %v845, 0.0625
      %v850 = vmul.f32 %v848, %v848
      %v851 = vsub.f32 %v849, %v850
      %v852 = vadd.f32 %v851, 1e-05
      %v853 = vrsqrt.pop %v852
      %v855 = vsel %vm463, %v853, 0
      %857 = vmatprep.subr.mxu0 0.0
      %858 = vmatpush1.msra.mxu0 %v230
      %859 = vmatprep.subr.mxu0 0.0
      %860 = vmatpush1.msra.mxu0 0.0
      %861 = vmatprep.subr.mxu0 0.0
      %862 = vmatpush1.msra.mxu0 0.0
      %863 = vmatprep.subr.mxu0 0.0
      %864 = vmatpush1.msra.mxu0 0.0
      %865 = vmatprep.subr.mxu0 0.0
      %866 = vmatpush1.msra.mxu0 0.0
      %867 = vmatprep.subr.mxu0 0.0
      %868 = vmatpush1.msra.mxu0 0.0
      %869 = vmatprep.subr.mxu0 0.0
      %870 = vmatpush1.msra.mxu0 0.0
      %871 = vmatprep.subr.mxu0 0.0
      %872 = vmatpush1.msra.mxu0 0.0
      %873 = vmatprep.subr.mxu0 0.0
      %874 = vmatpush1.msra.mxu0 0.0
      %875 = vmatprep.subr.mxu0 0.0
      %876 = vmatpush1.msra.mxu0 0.0
      %877 = vmatprep.subr.mxu0 0.0
      %878 = vmatpush1.msra.mxu0 0.0
      %879 = vmatprep.subr.mxu0 0.0
      %880 = vmatpush1.msra.mxu0 0.0
      %881 = vmatprep.subr.mxu0 0.0
      %882 = vmatpush1.msra.mxu0 0.0
      %883 = vmatprep.subr.mxu0 0.0
      %884 = vmatpush1.msra.mxu0 0.0
      %885 = vmatprep.subr.mxu0 0.0
      %886 = vmatpush1.msra.mxu0 0.0
      %887 = vmatprep.subr.mxu0 0.0
      %888 = vmatpush1.msra.mxu0 0.0
      %889 = vmatprep.subr.mxu0 0.0
      %890 = vmatpush1.msra.mxu0 0.0
      %891 = vmatprep.subr.mxu0 0.0
      %892 = vmatpush1.msra.mxu0 0.0
      %893 = vmatprep.subr.mxu0 0.0
      %894 = vmatpush1.msra.mxu0 0.0
      %895 = vmatprep.subr.mxu0 0.0
      %896 = vmatpush1.msra.mxu0 0.0
      %897 = vmatprep.subr.mxu0 0.0
      %898 = vmatpush1.msra.mxu0 0.0
      %899 = vmatprep.subr.mxu0 0.0
      %900 = vmatpush1.msra.mxu0 0.0
      %901 = vmatprep.subr.mxu0 0.0
      %902 = vmatpush1.msra.mxu0 0.0
      %903 = vmatprep.subr.mxu0 0.0
      %904 = vmatpush1.msra.mxu0 0.0
      %905 = vmatprep.subr.mxu0 0.0
      %906 = vmatpush1.msra.mxu0 0.0
      %907 = vmatprep.subr.mxu0 0.0
      %908 = vmatpush1.msra.mxu0 0.0
      %909 = vmatprep.subr.mxu0 0.0
      %910 = vmatpush1.msra.mxu0 0.0
      %911 = vmatprep.subr.mxu0 0.0
      %912 = vmatpush1.msra.mxu0 0.0
      %913 = vmatprep.subr.mxu0 0.0
      %914 = vmatpush1.msra.mxu0 0.0
      %915 = vmatprep.subr.mxu0 0.0
      %916 = vmatpush1.msra.mxu0 0.0
      %917 = vmatprep.subr.mxu0 0.0
      %918 = vmatpush1.msra.mxu0 0.0
      %919 = vmatprep.subr.mxu0 0.0
      %920 = vmatpush1.msra.mxu0 0.0
      %921 = vmatprep.mubr.f32.mxu0 0.0
      %922 = vmatmul.mubr.f32.gmra.mrb[0].mxu0 %v855
      %v923 = vpop.f32.mrb[0].mxu0
      %v924 = vadd.f32 0.0, %v923
      %v925 = vpop.f32.mrb[0].mxu0
      %926 = vdwg.mxu0
      %v927 = vmul.f32 %v848, %v853
      %v929 = vsel %vm463, %v927, 0
      %931 = vmatprep.subr.mxu0 0.0
      %932 = vmatpush1.msra.mxu0 %v230
      %933 = vmatprep.subr.mxu0 0.0
      %934 = vmatpush1.msra.mxu0 0.0
      %935 = vmatprep.subr.mxu0 0.0
      %936 = vmatpush1.msra.mxu0 0.0
      %937 = vmatprep.subr.mxu0 0.0
      %938 = vmatpush1.msra.mxu0 0.0
      %939 = vmatprep.subr.mxu0 0.0
      %940 = vmatpush1.msra.mxu0 0.0
      %941 = vmatprep.subr.mxu0 0.0
      %942 = vmatpush1.msra.mxu0 0.0
      %943 = vmatprep.subr.mxu0 0.0
      %944 = vmatpush1.msra.mxu0 0.0
      %945 = vmatprep.subr.mxu0 0.0
      %946 = vmatpush1.msra.mxu0 0.0
      %947 = vmatprep.subr.mxu0 0.0
      %948 = vmatpush1.msra.mxu0 0.0
      %949 = vmatprep.subr.mxu0 0.0
      %950 = vmatpush1.msra.mxu0 0.0
      %951 = vmatprep.subr.mxu0 0.0
      %952 = vmatpush1.msra.mxu0 0.0
      %953 = vmatprep.subr.mxu0 0.0
      %954 = vmatpush1.msra.mxu0 0.0
      %955 = vmatprep.subr.mxu0 0.0
      %956 = vmatpush1.msra.mxu0 0.0
      %957 = vmatprep.subr.mxu0 0.0
      %958 = vmatpush1.msra.mxu0 0.0
      %959 = vmatprep.subr.mxu0 0.0
      %960 = vmatpush1.msra.mxu0 0.0
      %961 = vmatprep.subr.mxu0 0.0
      %962 = vmatpush1.msra.mxu0 0.0
      %963 = vmatprep.subr.mxu0 0.0
      %964 = vmatpush1.msra.mxu0 0.0
      %965 = vmatprep.subr.mxu0 0.0
      %966 = vmatpush1.msra.mxu0 0.0
      %967 = vmatprep.subr.mxu0 0.0
      %968 = vmatpush1.msra.mxu0 0.0
      %969 = vmatprep.subr.mxu0 0.0
      %970 = vmatpush1.msra.mxu0 0.0
      %971 = vmatprep.subr.mxu0 0.0
      %972 = vmatpush1.msra.mxu0 0.0
      %973 = vmatprep.subr.mxu0 0.0
      %974 = vmatpush1.msra.mxu0 0.0
      %975 = vmatprep.subr.mxu0 0.0
      %976 = vmatpush1.msra.mxu0 0.0
      %977 = vmatprep.subr.mxu0 0.0
      %978 = vmatpush1.msra.mxu0 0.0
      %979 = vmatprep.subr.mxu0 0.0
      %980 = vmatpush1.msra.mxu0 0.0
      %981 = vmatprep.subr.mxu0 0.0
      %982 = vmatpush1.msra.mxu0 0.0
      %983 = vmatprep.subr.mxu0 0.0
      %984 = vmatpush1.msra.mxu0 0.0
      %985 = vmatprep.subr.mxu0 0.0
      %986 = vmatpush1.msra.mxu0 0.0
      %987 = vmatprep.subr.mxu0 0.0
      %988 = vmatpush1.msra.mxu0 0.0
      %989 = vmatprep.subr.mxu0 0.0
      %990 = vmatpush1.msra.mxu0 0.0
      %991 = vmatprep.subr.mxu0 0.0
      %992 = vmatpush1.msra.mxu0 0.0
      %993 = vmatprep.subr.mxu0 0.0
      %994 = vmatpush1.msra.mxu0 0.0
      %995 = vmatprep.mubr.f32.mxu0 0.0
      %996 = vmatmul.mubr.f32.gmra.mrb[0].mxu0 %v929
      %v997 = vpop.f32.mrb[0].mxu0
      %v998 = vadd.f32 0.0, %v997
      %v999 = vpop.f32.mrb[0].mxu0
      %1000 = vdwg.mxu0
      %v1001 = vmul.f32 %v698, %v924
      %v1002 = vsub.f32 %v1001, %v998
      %v1003 = vadd.f32 %v1002, %v617
      %v1005 = vcombine.high %v1003, %v1003
      %s1007 = scalar_lea.vmem %s223, 4
      %1008 = vst.msk [vmem:[%s1007] sm:$0xf] %vm623, %v1003
      %1009 = vst.msk [vmem:[%s1007 + $0x8] sm:$0xf] %vm623, %v1005
      %s1010 = smul.u32 2, %s16
      %p1011 = scmp.lt.s32.totalorder %s1010, 15
      %s1012 = scalar_select %p1011, %s1010, 15
      %s1013 = smul.addr %s1012, 2
      %s1014 = smul.addr %s1013, 4
      %s1015 = scalar_lea.vmem %s5, %s1014
      // Predicated region
      $region41: #{_lambda_.1} parent=39 // pred_check
        %p1016 = pneg %p144
      $region42: #{_lambda_.1} parent=39 // pred_check_branch
        %1018 = sbr.rel (%p1016) target = $region44
      $region43: #{_lambda_.1} parent=39 // pred_region
        %s1019 = smul.u32 2, %s16
      $region44: #{_lambda_.1} parent=39 // pred_fallthru
        _
    $region40: #{_lambda_.1} parent=5 // pred_fallthru
      _
    %p1020 = scmp.le.s32.totalorder 2, %s11
    // Predicated region
    $region45: #{_lambda_.1} parent=5 // pred_check
      %p1021 = pneg %p1020
    $region46: #{_lambda_.1} parent=5 // pred_check_branch
      %1023 = sbr.rel (%p1021) target = $region48
    $region47: #{_lambda_.1} parent=5 // pred_region
      %s1024 = ssub.s32 %s11, 2
      // Predicated region
      $region49: #{_lambda_.1} parent=47 // pred_check
        %p1025 = pneg %p150
      $region50: #{_lambda_.1} parent=47 // pred_check_branch
        %1027 = sbr.rel (%p1025) target = $region52
      $region51: #{_lambda_.1} parent=47 // pred_region
        %s1028 = smul.u32 2, %s17
        %p1029 = scmp.lt.s32.totalorder %s1028, 15
        %s1030 = scalar_select %p1029, %s1028, 15
        %s1031 = smul.addr %s1030, 2
        %s1032 = smul.addr %s1031, 4
        %s1033 = scalar_lea.vmem %s5, %s1032
      $region52: #{_lambda_.1} parent=47 // pred_fallthru
        _
    $region48: #{_lambda_.1} parent=5 // pred_fallthru
      _
  $region6: #{_lambda_.1} parent=0 // loop_footer
    %s15 = sadd.s32 1, %s11
  $region7: #{_lambda_.1} parent=0 // loop_footer_branch
    %10 = sbr.rel target = $region3
  $region8: #{_lambda_.1} parent=0 // loop_exit
    _

</llo_original>
